<compile_context>
chip_gen: v7x
topology: tpu7x:2x2x1
jax: 0.10.0
libtpu: 0.0.40
codegen_flags: <defaults>
</compile_context>

<pallas_src>
import functools

import jax
import jax.numpy as jnp
from jax import lax
from jax.experimental import pallas as pl
from jax.experimental.pallas import tpu as pltpu

_LANE = 128
_SUBLANE = 8
_MIB = 1024 * 1024


def _round_up(v, m):
    return (v + m - 1) // m * m


def _pick_tile(dim_padded, preferred):
    """Largest multiple of 128 <= preferred that divides dim_padded.

    dim_padded is always a multiple of 128, so this terminates at 128.
    """
    t = min(preferred, dim_padded)
    t = max(_LANE, (t // _LANE) * _LANE)
    while dim_padded % t:
        t -= _LANE
    return t


def _vmem_budget():
    """~75% of physical per-core VMEM (96 MiB v5e/v6e, 48 MiB v7x).

    Falls back to a conservative 48 MiB if the query is unavailable.
    """
    try:
        cap = int(pltpu.get_tpu_info().vmem_capacity_bytes)
    except Exception:
        cap = 64 * _MIB
    return max(32 * _MIB, (cap * 3) // 4)


# ----------------------------------------------------------------------------
# Kernels
# ----------------------------------------------------------------------------
def _affine_kernel_fused(x_ref, w_ref, b_ref, o_ref):
    """Fast path: whole K (and whole or half N) in one block.

    x_ref: (tm, Kp)   w_ref: (tn, Kp)   b_ref: (1, tn)   o_ref: (tm, tn)
    Contract last dims (x @ W^T) on the MXU; add bias; store once.
    """
    acc = lax.dot_general(
        x_ref[...], w_ref[...],
        dimension_numbers=(((1,), (1,)), ((), ())),
        preferred_element_type=jnp.float32,
    )
    o_ref[...] = (acc + b_ref[...].astype(jnp.float32)).astype(o_ref.dtype)


def _affine_kernel_f32_out(x_ref, w_ref, b_ref, o_ref):
    """Tiled path, f32 output: accumulate directly into the resident o block.

    Grid: (M_tiles, N_tiles, K_tiles), reduction (k) last.  Bias is fused into
    the k==0 init, so there is no extra finalize pass.
    """
    k = pl.program_id(2)

    @pl.when(k == 0)
    def _():
        o_ref[...] = jnp.broadcast_to(
            b_ref[...].astype(jnp.float32), o_ref.shape
        )

    o_ref[...] += lax.dot_general(
        x_ref[...], w_ref[...],
        dimension_numbers=(((1,), (1,)), ((), ())),
        preferred_element_type=jnp.float32,
    )


def _affine_kernel_acc(x_ref, w_ref, b_ref, o_ref, acc_ref):
    """Tiled path, non-f32 output: f32 VMEM accumulator (bias-initialized)."""
    k = pl.program_id(2)

    @pl.when(k == 0)
    def _():
        acc_ref[...] = jnp.broadcast_to(
            b_ref[...].astype(jnp.float32), acc_ref.shape
        )

    acc_ref[...] += lax.dot_general(
        x_ref[...], w_ref[...],
        dimension_numbers=(((1,), (1,)), ((), ())),
        preferred_element_type=jnp.float32,
    )

    @pl.when(k == pl.num_programs(2) - 1)
    def _():
        o_ref[...] = acc_ref[...].astype(o_ref.dtype)


# ----------------------------------------------------------------------------
# Wrapper
# ----------------------------------------------------------------------------
@functools.partial(
    jax.jit,
    static_argnames=("tm", "tn", "tk", "compute_dtype", "fast_path_weight_bytes"),
)
def affine_transform(
    x,
    weight,
    bias,
    *,
    tm=512,
    tn=512,
    tk=None,
    compute_dtype=None,
    fast_path_weight_bytes=None,
):
    """y = x @ weight.T + bias  (nn.Linear semantics).

    x:      [B, T, D_in]
    weight: [D_out, D_in]   (PyTorch nn.Linear convention, not transposed)
    bias:   [D_out]
    """
    B, T, D_in = x.shape
    D_out = weight.shape[0]
    M = B * T
    out_dtype = x.dtype
    out_itemsize = jnp.dtype(out_dtype).itemsize

    # Optional low-precision MXU path (keeps f32 accumulation + orig output dtype).
    if compute_dtype is not None:
        x = x.astype(compute_dtype)
        weight = weight.astype(compute_dtype)
    in_itemsize = jnp.dtype(x.dtype).itemsize
    row_align = _SUBLANE if (in_itemsize >= 4 and out_itemsize >= 4) else 16

    # Lane-align feature dims.  Zero padding is exact for a matmul (padded K
    # contributes 0; padded N columns are sliced off).  M is NOT padded: the
    # grid uses a partial last block and garbage rows are never stored.
    Kp = _round_up(D_in, _LANE)
    Np = _round_up(D_out, _LANE)

    x2 = x.reshape(M, D_in)
    if Kp != D_in:
        x2 = jnp.pad(x2, ((0, 0), (0, Kp - D_in)))      # must stay exact zeros
    w2 = weight
    if Kp != D_in or Np != D_out:
        w2 = jnp.pad(w2, ((0, Np - D_out), (0, Kp - D_in)))
    b2 = bias
    if Np != D_out:
        b2 = jnp.pad(b2, (0, Np - D_out))
    b2 = b2.reshape(1, Np)

    budget = _vmem_budget()
    if fast_path_weight_bytes is None:
        fast_path_weight_bytes = budget // 3
    w_bytes = (Np * Kp + Np) * in_itemsize
    use_fast = w_bytes <= fast_path_weight_bytes

    if use_fast:
        # --- Fast path: weight resident in VMEM (single copy), grid over M ---
        tm_f = M if M <= 512 else 512                    # 512 % 16 == 0

        def _fast_est(tmv):
            return (
                2 * tmv * Kp * in_itemsize               # x, double-buffered
                + (Np * Kp + Np) * in_itemsize           # W + bias, single copy
                + 2 * tmv * Np * out_itemsize            # out, double-buffered
            )

        while tm_f > row_align and _fast_est(tm_f) > (budget * 4) // 5:
            tm_f = max(row_align, _round_up(tm_f // 2, row_align))
        tm_f = min(tm_f, M)                              # full-dim block is always legal
        m_blocks = pl.cdiv(M, tm_f)

        # On v7x (2 TensorCores) a length-1 grid uses one core; when M fits a
        # single block, split N so the grid has >= 2 parallel points.
        tn_f = Np
        if m_blocks < 2 and Np >= 2 * _LANE:
            tn_f = _pick_tile(Np, max(Np // 2, _LANE))
        n_blocks = Np // tn_f

        if n_blocks == 1:
            grid = (m_blocks,)
            in_specs = [
                pl.BlockSpec((tm_f, Kp), lambda i: (i, 0)),            # x
                # Whole weight/bias resident in VMEM: single-buffered, streamed
                # from HBM exactly once.
                pl.BlockSpec(memory_space=pltpu.MemorySpace.VMEM),     # W
                pl.BlockSpec(memory_space=pltpu.MemorySpace.VMEM),     # bias
            ]
            out_spec = pl.BlockSpec((tm_f, Np), lambda i: (i, 0))
            dims = ("parallel",)
        else:
            # N-outer / M-inner so each W slice is streamed once.
            grid = (n_blocks, m_blocks)
            in_specs = [
                pl.BlockSpec((tm_f, Kp), lambda j, i: (i, 0)),         # x
                pl.BlockSpec((tn_f, Kp), lambda j, i: (j, 0)),         # W
                pl.BlockSpec((1, tn_f), lambda j, i: (0, j)),          # bias
            ]
            out_spec = pl.BlockSpec((tm_f, tn_f), lambda j, i: (i, j))
            dims = ("parallel", "parallel")

        out = pl.pallas_call(
            _affine_kernel_fused,
            out_shape=jax.ShapeDtypeStruct((M, Np), out_dtype),
            grid_spec=pltpu.PrefetchScalarGridSpec(
                num_scalar_prefetch=0,
                grid=grid,
                in_specs=in_specs,
                out_specs=out_spec,
            ),
            compiler_params=pltpu.CompilerParams(
                dimension_semantics=dims,
                vmem_limit_bytes=budget,
            ),
        )(x2, w2, b2)
    else:
        # --- Tiled path: big MXU-shaped tiles, k-last reduction grid ---------
        tk_pref = tk if tk is not None else (1024 if Kp % 1024 == 0 else 512)
        tn_c = _pick_tile(Np, max(tn, _LANE))
        tk_c = _pick_tile(Kp, max(tk_pref, _LANE))
        tm_aligned = max(row_align, (tm // row_align) * row_align)
        tm_c = min(tm_aligned, M)                        # full-dim block if M small

        grid = (pl.cdiv(M, tm_c), Np // tn_c, Kp // tk_c)

        in_specs = [
            pl.BlockSpec((tm_c, tk_c), lambda i, j, k: (i, k)),   # x
            pl.BlockSpec((tn_c, tk_c), lambda i, j, k: (j, k)),   # W (untransposed)
            pl.BlockSpec((1, tn_c), lambda i, j, k: (0, j)),      # bias
        ]
        out_spec = pl.BlockSpec((tm_c, tn_c), lambda i, j, k: (i, j))
        compiler_params = pltpu.CompilerParams(
            dimension_semantics=("parallel", "parallel", "arbitrary"),
            vmem_limit_bytes=budget,
        )

        if jnp.dtype(out_dtype) == jnp.dtype(jnp.float32):
            # Output block is resident across k -> accumulate in-place, no scratch.
            out = pl.pallas_call(
                _affine_kernel_f32_out,
                out_shape=jax.ShapeDtypeStruct((M, Np), out_dtype),
                grid_spec=pltpu.PrefetchScalarGridSpec(
                    num_scalar_prefetch=0,
                    grid=grid,
                    in_specs=in_specs,
                    out_specs=out_spec,
                ),
                compiler_params=compiler_params,
            )(x2, w2, b2)
        else:
            out = pl.pallas_call(
                _affine_kernel_acc,
                out_shape=jax.ShapeDtypeStruct((M, Np), out_dtype),
                grid_spec=pltpu.PrefetchScalarGridSpec(
                    num_scalar_prefetch=0,
                    grid=grid,
                    in_specs=in_specs,
                    out_specs=out_spec,
                    scratch_shapes=[pltpu.VMEM((tm_c, tn_c), jnp.float32)],
                ),
                compiler_params=compiler_params,
            )(x2, w2, b2)

    if Np != D_out:
        out = out[:, :D_out]
    return out.reshape(B, T, D_out)


if __name__ == "__main__":
    key = jax.random.PRNGKey(0)
    (kx, kw, kb, k2x, k2w, k2b, k3x, k3w, k3b, k4w, k4b) = jax.random.split(key, 11)

    # ---- Test 1: module shape (AffineTransform(32, 64)), fast path ----------
    input_dim, output_dim = 32, 64
    B, T = 2, 8
    x = jax.random.normal(kx, (B, T, input_dim), dtype=jnp.float32)
    bound = 1.0 / jnp.sqrt(input_dim)
    weight = jax.random.uniform(
        kw, (output_dim, input_dim), minval=-bound, maxval=bound, dtype=jnp.float32
    )
    bias = jax.random.uniform(
        kb, (output_dim,), minval=-bound, maxval=bound, dtype=jnp.float32
    )
    y = affine_transform(x, weight, bias)
    jax.block_until_ready(y)
    y_ref = x @ weight.T + bias
    assert y.shape == (B, T, output_dim)
    assert jnp.allclose(y, y_ref, atol=1e-5, rtol=1e-5)

    # ---- Test 2: force the tiled (3-D grid) path, ragged M, f32 output ------
    d_in2, d_out2 = 1024, 256
    B2, T2 = 2, 136  # M = 272: not a multiple of the tile -> exercises partial block
    x2 = jax.random.normal(k2x, (B2, T2, d_in2), dtype=jnp.float32)
    w2 = jax.random.normal(k2w, (d_out2, d_in2), dtype=jnp.float32) * 0.02
    b2_ = jax.random.normal(k2b, (d_out2,), dtype=jnp.float32) * 0.02
    y2 = affine_transform(x2, w2, b2_, fast_path_weight_bytes=0)
    jax.block_until_ready(y2)
    y2_ref = x2 @ w2.T + b2_
    assert y2.shape == (B2, T2, d_out2)
    assert jnp.allclose(y2, y2_ref, atol=1e-3, rtol=1e-3)

    # ---- Test 3: tiled path with bf16 I/O (f32 VMEM accumulator kernel) -----
    d_in3, d_out3 = 256, 384
    B3, T3 = 1, 64
    x3 = jax.random.normal(k3x, (B3, T3, d_in3), dtype=jnp.float32).astype(jnp.bfloat16)
    w3 = (jax.random.normal(k3w, (d_out3, d_in3), dtype=jnp.float32) * 0.02).astype(jnp.bfloat16)
    b3 = (jax.random.normal(k3b, (d_out3,), dtype=jnp.float32) * 0.02).astype(jnp.bfloat16)
    y3 = affine_transform(x3, w3, b3, fast_path_weight_bytes=0)
    jax.block_until_ready(y3)
    y3_ref = (x3.astype(jnp.float32) @ w3.astype(jnp.float32).T
              + b3.astype(jnp.float32))
    assert y3.shape == (B3, T3, d_out3)
    assert jnp.allclose(y3.astype(jnp.float32), y3_ref, atol=2e-2, rtol=2e-2)

    # ---- Test 4: fast path with N-split (tiny M, D_out >= 256) --------------
    d_in4, d_out4 = 32, 256
    x4 = x  # (2, 8, 32)
    bound4 = 1.0 / jnp.sqrt(d_in4)
    w4 = jax.random.uniform(
        k4w, (d_out4, d_in4), minval=-bound4, maxval=bound4, dtype=jnp.float32
    )
    b4 = jax.random.uniform(
        k4b, (d_out4,), minval=-bound4, maxval=bound4, dtype=jnp.float32
    )
    y4 = affine_transform(x4, w4, b4)
    jax.block_until_ready(y4)
    y4_ref = x4 @ w4.T + b4
    assert y4.shape == (B, T, d_out4)
    assert jnp.allclose(y4, y4_ref, atol=1e-5, rtol=1e-5)

    print("KERNEL_OK")
</pallas_src>

<mosaic_0001>
module attributes {stable_mosaic.version = 11 : i64} {
  func.func @_affine_kernel_fused(%arg0: i32, %arg1: memref<16x128xf32, #tpu.memory_space<vmem>>, %arg2: memref<128x128xf32, #tpu.memory_space<vmem>>, %arg3: memref<1x128xf32, #tpu.memory_space<vmem>>, %arg4: memref<16x128xf32, #tpu.memory_space<vmem>>) attributes {dimension_semantics = [#tpu.dimension_semantics<parallel>], iteration_bounds = array<i64: 1>, scalar_prefetch = 0 : i64, scratch_operands = 0 : i64, tpu.core_type = #tpu.core_type<tc>, window_params = [{transform_indices = @transform_0, window_bounds = array<i64: 16, 128>}, {pipeline_mode = #tpu.pipeline_mode<synchronous>, transform_indices = @transform_1, window_bounds = array<i64: 128, 128>}, {pipeline_mode = #tpu.pipeline_mode<synchronous>, transform_indices = @transform_2, window_bounds = array<i64: 1, 128>}, {transform_indices = @transform_3, window_bounds = array<i64: 16, 128>}]} {
    %c0 = arith.constant 0 : index
    %c0_0 = arith.constant 0 : index
    %0 = vector.load %arg1[%c0, %c0_0] : memref<16x128xf32, #tpu.memory_space<vmem>>, vector<16x128xf32>
    %c0_1 = arith.constant 0 : index
    %c0_2 = arith.constant 0 : index
    %1 = vector.load %arg2[%c0_1, %c0_2] : memref<128x128xf32, #tpu.memory_space<vmem>>, vector<128x128xf32>
    %cst = arith.constant dense<0.000000e+00> : vector<16x128xf32>
    %2 = tpu.matmul %0, %1, %cst {dimension_numbers = #tpu.dot_dimension_numbers<[1], [1], [0], [0], [0, 0, 1, 0], [], []>} : vector<16x128xf32>, vector<128x128xf32>, vector<16x128xf32> -> vector<16x128xf32>
    %c0_3 = arith.constant 0 : index
    %c0_4 = arith.constant 0 : index
    %3 = vector.load %arg3[%c0_3, %c0_4] : memref<1x128xf32, #tpu.memory_space<vmem>>, vector<1x128xf32>
    %4 = vector.broadcast %3 : vector<1x128xf32> to vector<16x128xf32>
    %5 = arith.addf %2, %4 : vector<16x128xf32>
    %c0_5 = arith.constant 0 : index
    %c0_6 = arith.constant 0 : index
    %6 = vector.load %arg4[%c0_5, %c0_6] : memref<16x128xf32, #tpu.memory_space<vmem>>, vector<16x128xf32>
    tpu.vector_store %arg4[%c0_5, %c0_6], %5 {strides = array<i32>} : memref<16x128xf32, #tpu.memory_space<vmem>>, vector<16x128xf32>,
    return
  }
  func.func @transform_0(%arg0: i32) -> (i32, i32) {
    %c0_i32 = arith.constant 0 : i32
    %c0_i32_0 = arith.constant 0 : i32
    return %arg0, %c0_i32 : i32, i32
  }
  func.func @transform_1(%arg0: i32) -> (i32, i32) {
    %c0_i32 = arith.constant 0 : i32
    %c0_i32_0 = arith.constant 0 : i32
    %c0_i32_1 = arith.constant 0 : i32
    return %c0_i32, %c0_i32_0 : i32, i32
  }
  func.func @transform_2(%arg0: i32) -> (i32, i32) {
    %c0_i32 = arith.constant 0 : i32
    %c0_i32_0 = arith.constant 0 : i32
    %c0_i32_1 = arith.constant 0 : i32
    return %c0_i32, %c0_i32_0 : i32, i32
  }
  func.func @transform_3(%arg0: i32) -> (i32, i32) {
    %c0_i32 = arith.constant 0 : i32
    %c0_i32_0 = arith.constant 0 : i32
    return %arg0, %c0_i32 : i32, i32
  }
}

</mosaic_0001>

<llo_original>
// kernel: affine_transform.1
$region0: #{affine_transform.1}
  #allocation0 [shape = 'u32[]', space=smem, size = 0x4, offset = 0x4, fixed_abs, tag = 'smem constant byte address 0x4 - core index']
  #allocation1 [shape = 'u32[144,128]{1,0:T(1,128)}', space=vmem, size = 0x12000, scoped, tag = 'internal scratch']
  %s0 = inlined_call_operand.vmem [shape: f32[16,128], index: 0, kind: input, shape index: {}]
  %s1 = inlined_call_operand.vmem [shape: f32[128,128], index: 1, kind: input, shape index: {}]
  %s2 = inlined_call_operand.vmem [shape: f32[1,128], index: 2, kind: input, shape index: {}]
  %s3 = inlined_call_operand.vmem [shape: f32[16,128], index: 3, kind: output, shape index: {}]
  %s4 = sld [smem:[#allocation0]]
  $region22: #{affine_transform.1} parent=0
    _
  %s6 = ssub.s32 1, %s4
  %s7 = scalar_select 0, %s6, %s4
  // Predicated region
  $region2: #{affine_transform.1} parent=0 // pred_check
    _
  $region3: #{affine_transform.1} parent=0 // pred_check_branch
    %9 = sbr.rel (0) target = $region5
  $region4: #{affine_transform.1} parent=0 // pred_region
    _
  $region5: #{affine_transform.1} parent=0 // pred_fallthru
    _
  // Predicated region
  $region6: #{affine_transform.1} parent=0 // pred_check
    _
  $region7: #{affine_transform.1} parent=0 // pred_check_branch
    %11 = sbr.rel (0) target = $region9
  $region8: #{affine_transform.1} parent=0 // pred_region
    _
  $region9: #{affine_transform.1} parent=0 // pred_fallthru
    _
  // Predicated region
  $region10: #{affine_transform.1} parent=0 // pred_check
    _
  $region11: #{affine_transform.1} parent=0 // pred_check_branch
    %13 = sbr.rel (0) target = $region13
  $region12: #{affine_transform.1} parent=0 // pred_region
    _
  $region13: #{affine_transform.1} parent=0 // pred_fallthru
    _
  %v14 = vld [vmem:[%s0] sm:$0xff]
  %v15 = vld [vmem:[%s0 + $0x8] sm:$0xff]
  %v16 = vld [vmem:[%s1] sm:$0xff]
  %v17 = vld [vmem:[%s1 + $0x8] sm:$0xff]
  %v18 = vld [vmem:[%s1 + $0x10] sm:$0xff]
  %v19 = vld [vmem:[%s1 + $0x18] sm:$0xff]
  %v20 = vld [vmem:[%s1 + $0x20] sm:$0xff]
  %v21 = vld [vmem:[%s1 + $0x28] sm:$0xff]
  %v22 = vld [vmem:[%s1 + $0x30] sm:$0xff]
  %v23 = vld [vmem:[%s1 + $0x38] sm:$0xff]
  %v24 = vld [vmem:[%s1 + $0x40] sm:$0xff]
  %v25 = vld [vmem:[%s1 + $0x48] sm:$0xff]
  %v26 = vld [vmem:[%s1 + $0x50] sm:$0xff]
  %v27 = vld [vmem:[%s1 + $0x58] sm:$0xff]
  %v28 = vld [vmem:[%s1 + $0x60] sm:$0xff]
  %v29 = vld [vmem:[%s1 + $0x68] sm:$0xff]
  %v30 = vld [vmem:[%s1 + $0x70] sm:$0xff]
  %v31 = vld [vmem:[%s1 + $0x78] sm:$0xff]
  %v32 = vld [vmem:[%s2] sm:$0x1]
  %v34 = vlaneseq
  %v35 = vshrl.u32 %v34, 7
  %v36 = vsub.s32 0, %v35
  %v37 = vrot.slane %v32, %v36
  %39 = vmatprep.subr.mxu0 0.0
  %40 = vmatpush1.xpose.msra.mxu0 %v16
  %41 = vmatprep.subr.mxu0 0.0
  %42 = vmatpush1.xpose.msra.mxu0 %v17
  %43 = vmatprep.subr.mxu0 0.0
  %44 = vmatpush1.xpose.msra.mxu0 %v18
  %45 = vmatprep.subr.mxu0 0.0
  %46 = vmatpush1.xpose.msra.mxu0 %v19
  %47 = vmatprep.subr.mxu0 0.0
  %48 = vmatpush1.xpose.msra.mxu0 %v20
  %49 = vmatprep.subr.mxu0 0.0
  %50 = vmatpush1.xpose.msra.mxu0 %v21
  %51 = vmatprep.subr.mxu0 0.0
  %52 = vmatpush1.xpose.msra.mxu0 %v22
  %53 = vmatprep.subr.mxu0 0.0
  %54 = vmatpush1.xpose.msra.mxu0 %v23
  %55 = vmatprep.subr.mxu0 0.0
  %56 = vmatpush1.xpose.msra.mxu0 %v24
  %57 = vmatprep.subr.mxu0 0.0
  %58 = vmatpush1.xpose.msra.mxu0 %v25
  %59 = vmatprep.subr.mxu0 0.0
  %60 = vmatpush1.xpose.msra.mxu0 %v26
  %61 = vmatprep.subr.mxu0 0.0
  %62 = vmatpush1.xpose.msra.mxu0 %v27
  %63 = vmatprep.subr.mxu0 0.0
  %64 = vmatpush1.xpose.msra.mxu0 %v28
  %65 = vmatprep.subr.mxu0 0.0
  %66 = vmatpush1.xpose.msra.mxu0 %v29
  %67 = vmatprep.subr.mxu0 0.0
  %68 = vmatpush1.xpose.msra.mxu0 %v30
  %69 = vmatprep.subr.mxu0 0.0
  %70 = vmatpush1.xpose.msra.mxu0 %v31
  %71 = vmatprep.subr.mxu0 0.0
  %72 = vmatpush1.xpose.msra.mxu0 0.0
  %73 = vmatprep.subr.mxu0 0.0
  %74 = vmatpush1.xpose.msra.mxu0 0.0
  %75 = vmatprep.subr.mxu0 0.0
  %76 = vmatpush1.xpose.msra.mxu0 0.0
  %77 = vmatprep.subr.mxu0 0.0
  %78 = vmatpush1.xpose.msra.mxu0 0.0
  %79 = vmatprep.subr.mxu0 0.0
  %80 = vmatpush1.xpose.msra.mxu0 0.0
  %81 = vmatprep.subr.mxu0 0.0
  %82 = vmatpush1.xpose.msra.mxu0 0.0
  %83 = vmatprep.subr.mxu0 0.0
  %84 = vmatpush1.xpose.msra.mxu0 0.0
  %85 = vmatprep.subr.mxu0 0.0
  %86 = vmatpush1.xpose.msra.mxu0 0.0
  %87 = vmatprep.subr.mxu0 0.0
  %88 = vmatpush1.xpose.msra.mxu0 0.0
  %89 = vmatprep.subr.mxu0 0.0
  %90 = vmatpush1.xpose.msra.mxu0 0.0
  %91 = vmatprep.subr.mxu0 0.0
  %92 = vmatpush1.xpose.msra.mxu0 0.0
  %93 = vmatprep.subr.mxu0 0.0
  %94 = vmatpush1.xpose.msra.mxu0 0.0
  %95 = vmatprep.subr.mxu0 0.0
  %96 = vmatpush1.xpose.msra.mxu0 0.0
  %97 = vmatprep.subr.mxu0 0.0
  %98 = vmatpush1.xpose.msra.mxu0 0.0
  %99 = vmatprep.subr.mxu0 0.0
  %100 = vmatpush1.xpose.msra.mxu0 0.0
  %101 = vmatprep.subr.mxu0 0.0
  %102 = vmatpush1.xpose.msra.mxu0 0.0
  %103 = vmatprep.mubr.f32.mxu0 0.0
  %104 = vmatmul.mubr.f32.gmra.mrb[0].mxu0 %v14
  %v105 = vpop.f32.mrb[0].mxu0
  %v106 = vadd.f32 %v37, %v105
  %v107 = vpop.f32.mrb[0].mxu0
  %108 = vmatprep.mubr.f32.mxu0 0.0
  %109 = vmatmul.mubr.f32.gmra.mrb[0].mxu0 %v15
  %v110 = vpop.f32.mrb[0].mxu0
  %v111 = vadd.f32 %v37, %v110
  %v112 = vpop.f32.mrb[0].mxu0
  %113 = vdwg.mxu0
  %114 = vst [vmem:[%s3] sm:$0xff] %v106
  %115 = vst [vmem:[%s3 + $0x8] sm:$0xff] %v111
  // Predicated region
  $region14: #{affine_transform.1} parent=0 // pred_check
    _
  $region15: #{affine_transform.1} parent=0 // pred_check_branch
    %117 = sbr.rel (0) target = $region17
  $region16: #{affine_transform.1} parent=0 // pred_region
    _
  $region17: #{affine_transform.1} parent=0 // pred_fallthru
    _
  // Predicated region
  $region18: #{affine_transform.1} parent=0 // pred_check
    _
  $region19: #{affine_transform.1} parent=0 // pred_check_branch
    %119 = sbr.rel (0) target = $region21
  $region20: #{affine_transform.1} parent=0 // pred_region
    _
  $region21: #{affine_transform.1} parent=0 // pred_fallthru
    _

</llo_original>
